<compile_context>
chip_gen: v7x
topology: tpu7x:2x2x1
jax: 0.10.0
libtpu: 0.0.40
codegen_flags: <defaults>
</compile_context>

<pallas_src>
import functools

import jax
import jax.numpy as jnp
from jax.experimental import pallas as pl
from jax.experimental.pallas import tpu as pltpu


def _multi_gtu_kernel(R, xc_ref, wg_ref, bg_ref, fcw_ref, fcb_ref, o_ref):
    """One batch element.

    xc_ref : (T, k_max*R)  hoisted im2col of x; column block dt holds x shifted
             by dt along time (zero beyond range); dt=0 block is x itself.
    wg_ref : (k_max*R, n_gtu*2R) stacked (tap-padded, kron-expanded) GTU weights.
    bg_ref : (1, n_gtu*2R) stacked conv biases.
    fcw_ref: (T, n_gtu*T) stacked fcmy weights, zero-masked past each t_out_i.
    fcb_ref: (T, 1) fcmy bias.
    o_ref  : (T, R) output tile (time on sublanes, (channel, node) on lanes).
    """
    xc = xc_ref[...].astype(jnp.float32)                      # (T, k_max*R)
    x = xc[:, :R]                                             # residual = dt=0 block

    # All three GTU convs as ONE MXU matmul over the hoisted im2col columns.
    y = jnp.dot(xc, wg_ref[...],
                preferred_element_type=jnp.float32) + bg_ref[...]   # (T, n_gtu*2R)

    n_gtu = wg_ref.shape[1] // (2 * R)
    gs = []
    for i in range(n_gtu):
        yi = y[:, i * 2 * R:(i + 1) * 2 * R]                  # (T, 2R), 128-aligned slice
        gs.append(jnp.tanh(yi[:, :R]) * jax.nn.sigmoid(yi[:, R:]))
    # Stack gated outputs along sublanes (offsets are multiples of T=16 -> cheap).
    g = jnp.concatenate(gs, axis=0)                           # (n_gtu*T, R)

    # Single fused fcmy matmul; zero-masked fcw columns kill the invalid
    # (t >= t_out_i) rows of g, so no per-GTU slicing is needed.
    fc = jnp.dot(fcw_ref[...], g, preferred_element_type=jnp.float32)   # (T, R)

    o_ref[...] = jnp.maximum(x + fc + fcb_ref[...], 0.0).astype(o_ref.dtype)


def pack_multi_gtu_params(params, kernel_sizes, num_nodes, num_timesteps):
    """One-time weight repacking (call once, reuse across forward calls)."""
    N, T = num_nodes, num_timesteps
    two_c, C, _, _ = params["w0"].shape
    R = C * N
    k_max = max(kernel_sizes)
    eye = jnp.eye(N, dtype=jnp.float32)

    wg_blocks, bg_blocks = [], []
    for i, k in enumerate(kernel_sizes):
        w = params[f"w{i}"].astype(jnp.float32)[:, :, 0, :]   # (2C, C, k) OIHW -> OCk
        # rows (dt, c, n), cols (o, m): kron over nodes (block-diagonal over N).
        wi = jnp.einsum("ocd,nm->dcnom", w, eye).reshape(k * R, 2 * R)
        wi = jnp.pad(wi, ((0, (k_max - k) * R), (0, 0)))       # pad taps to k_max
        wg_blocks.append(wi)
        bg_blocks.append(jnp.repeat(params[f"b{i}"].astype(jnp.float32), N))
    wg = jnp.concatenate(wg_blocks, axis=1)                    # (k_max*R, 3*2R)
    bg = jnp.concatenate(bg_blocks)[None, :]                   # (1, 3*2R)

    fcw = params["fcw"].astype(jnp.float32)                    # (T, l_cat)
    fcw_blocks, off = [], 0
    for k in kernel_sizes:
        t_out = T - k + 1
        blk = fcw[:, off:off + t_out]
        blk = jnp.pad(blk, ((0, 0), (0, T - t_out)))           # zero-mask invalid rows
        fcw_blocks.append(blk)
        off += t_out
    fcw_stack = jnp.concatenate(fcw_blocks, axis=1)            # (T, 3T)
    fcb = params["fcb"].astype(jnp.float32).reshape(T, 1)      # (T, 1)
    return wg, bg, fcw_stack, fcb


@functools.partial(jax.jit, static_argnames=("kernel_sizes",))
def multi_gtu_forward(x, packed, kernel_sizes):
    """x: (B, C, N, T) float32, PyTorch NCHW convention."""
    wg, bg, fcw_stack, fcb = packed
    B, C, N, T = x.shape
    R = C * N
    k_max = max(kernel_sizes)

    # Lane-dense layout: time on sublanes, (channel, node) on lanes.
    x_t = jnp.transpose(x, (0, 3, 1, 2)).reshape(B, T, R)      # (B, T, R)
    # im2col hoisted to the wrapper (x is tiny): block dt = x shifted by dt,
    # zero-padded beyond the valid time range.
    cols = [x_t] + [jnp.pad(x_t[:, dt:, :], ((0, 0), (0, dt), (0, 0)))
                    for dt in range(1, k_max)]
    xc = jnp.concatenate(cols, axis=2)                         # (B, T, k_max*R)

    kernel = functools.partial(_multi_gtu_kernel, R)

    def const_spec(shape):
        return pl.BlockSpec(shape, lambda b: (0,) * len(shape))

    out = pl.pallas_call(
        kernel,
        out_shape=jax.ShapeDtypeStruct((B, T, R), jnp.float32),
        grid=(B,),
        in_specs=[
            pl.BlockSpec((pl.Squeezed(), T, k_max * R), lambda b: (b, 0, 0)),
            const_spec(wg.shape), const_spec(bg.shape),
            const_spec(fcw_stack.shape), const_spec(fcb.shape),
        ],
        out_specs=pl.BlockSpec((pl.Squeezed(), T, R), lambda b: (b, 0, 0)),
        compiler_params=pltpu.CompilerParams(
            dimension_semantics=("parallel",)),
    )(xc, wg, bg, fcw_stack, fcb)

    # (B, T, C*N) -> (B, C, N, T)
    return jnp.transpose(out.reshape(B, T, C, N), (0, 2, 3, 1))


def multi_gtu_reference(x, params, kernel_sizes):
    """Pure-JAX reference matching the PyTorch forward (eval mode)."""
    C = x.shape[1]
    outs = []
    for i, _ in enumerate(kernel_sizes):
        w = params[f"w{i}"]
        b = params[f"b{i}"]
        y = jax.lax.conv_general_dilated(
            x, w, window_strides=(1, 1), padding="VALID",
            dimension_numbers=("NCHW", "OIHW", "NCHW"),
            precision=jax.lax.Precision.HIGHEST)
        y = y + b[None, :, None, None]
        p, q = y[:, :C], y[:, C:]
        outs.append(jnp.tanh(p) * jax.nn.sigmoid(q))
    cat = jnp.concatenate(outs, axis=-1)          # (B, C, N, l_cat)
    fc = jnp.einsum("bcnl,tl->bcnt", cat, params["fcw"],
                    precision=jax.lax.Precision.HIGHEST) + params["fcb"]
    return jax.nn.relu(x + fc)


if __name__ == "__main__":
    B, C, N, T = 2, 4, 16, 16
    kernel_sizes = (3, 5, 7)
    l_cat = 3 * T - sum(kernel_sizes) + 3         # = 36

    key = jax.random.PRNGKey(0)
    keys = jax.random.split(key, 9)
    params = {}
    for i, k in enumerate(kernel_sizes):
        params[f"w{i}"] = 0.1 * jax.random.normal(
            keys[2 * i], (2 * C, C, 1, k), jnp.float32)
        params[f"b{i}"] = 0.1 * jax.random.normal(
            keys[2 * i + 1], (2 * C,), jnp.float32)
    params["fcw"] = 0.1 * jax.random.normal(keys[6], (T, l_cat), jnp.float32)
    params["fcb"] = 0.1 * jax.random.normal(keys[7], (T,), jnp.float32)
    x = jax.random.normal(keys[8], (B, C, N, T), jnp.float32)

    # One-time weight repacking (kept out of the per-call forward path).
    packed = jax.tree_util.tree_map(
        jax.block_until_ready,
        pack_multi_gtu_params(params, kernel_sizes, N, T))

    out = jax.block_until_ready(multi_gtu_forward(x, packed, kernel_sizes))
    ref = multi_gtu_reference(x, params, kernel_sizes)

    assert out.shape == (B, C, N, T), out.shape
    err = float(jnp.max(jnp.abs(out - ref)))
    if err > 2e-3:
        raise AssertionError(f"kernel/reference mismatch: max abs err {err}")
    print("KERNEL_OK")
</pallas_src>

<mosaic_0001>
module attributes {stable_mosaic.version = 11 : i64} {
  func.func @_multi_gtu_kernel(%arg0: i32, %arg1: memref<1x16x448xf32, #tpu.memory_space<vmem>>, %arg2: memref<448x384xf32, #tpu.memory_space<vmem>>, %arg3: memref<1x384xf32, #tpu.memory_space<vmem>>, %arg4: memref<16x48xf32, #tpu.memory_space<vmem>>, %arg5: memref<16x1xf32, #tpu.memory_space<vmem>>, %arg6: memref<1x16x64xf32, #tpu.memory_space<vmem>>) attributes {dimension_semantics = [#tpu.dimension_semantics<parallel>], iteration_bounds = array<i64: 2>, scalar_prefetch = 0 : i64, scratch_operands = 0 : i64, tpu.core_type = #tpu.core_type<tc>, window_params = [{transform_indices = @transform_0, window_bounds = array<i64: 1, 16, 448>}, {pipeline_mode = #tpu.pipeline_mode<synchronous>, transform_indices = @transform_1, window_bounds = array<i64: 448, 384>}, {pipeline_mode = #tpu.pipeline_mode<synchronous>, transform_indices = @transform_2, window_bounds = array<i64: 1, 384>}, {pipeline_mode = #tpu.pipeline_mode<synchronous>, transform_indices = @transform_3, window_bounds = array<i64: 16, 48>}, {pipeline_mode = #tpu.pipeline_mode<synchronous>, transform_indices = @transform_4, window_bounds = array<i64: 16, 1>}, {transform_indices = @transform_5, window_bounds = array<i64: 1, 16, 64>}]} {
    %c0 = arith.constant 0 : index
    %c0_0 = arith.constant 0 : index
    %c0_1 = arith.constant 0 : index
    %0 = vector.load %arg1[%c0, %c0_0, %c0_1] : memref<1x16x448xf32, #tpu.memory_space<vmem>>, vector<1x16x448xf32>
    %1 = vector.shape_cast %0 : vector<1x16x448xf32> to vector<16x448xf32>
    %2 = vector.extract_strided_slice %1 {offsets = [0, 0], sizes = [16, 64], strides = [1, 1]} : vector<16x448xf32> to vector<16x64xf32>
    %c0_2 = arith.constant 0 : index
    %c0_3 = arith.constant 0 : index
    %3 = vector.load %arg2[%c0_2, %c0_3] : memref<448x384xf32, #tpu.memory_space<vmem>>, vector<448x384xf32>
    %cst = arith.constant dense<0.000000e+00> : vector<16x384xf32>
    %4 = tpu.matmul %1, %3, %cst {dimension_numbers = #tpu.dot_dimension_numbers<[1], [0], [0], [1], [0, 0, 1, 1], [], []>} : vector<16x448xf32>, vector<448x384xf32>, vector<16x384xf32> -> vector<16x384xf32>
    %c0_4 = arith.constant 0 : index
    %c0_5 = arith.constant 0 : index
    %5 = vector.load %arg3[%c0_4, %c0_5] : memref<1x384xf32, #tpu.memory_space<vmem>>, vector<1x384xf32>
    %6 = vector.broadcast %5 : vector<1x384xf32> to vector<16x384xf32>
    %7 = arith.addf %4, %6 : vector<16x384xf32>
    %8 = vector.extract_strided_slice %7 {offsets = [0, 0], sizes = [16, 128], strides = [1, 1]} : vector<16x384xf32> to vector<16x128xf32>
    %9 = vector.extract_strided_slice %8 {offsets = [0, 0], sizes = [16, 64], strides = [1, 1]} : vector<16x128xf32> to vector<16x64xf32>
    %10 = math.tanh %9 : vector<16x64xf32>
    %11 = vector.extract_strided_slice %8 {offsets = [0, 64], sizes = [16, 64], strides = [1, 1]} : vector<16x128xf32> to vector<16x64xf32>
    %12 = arith.negf %11 : vector<16x64xf32>
    %13 = math.exp %12 : vector<16x64xf32>
    %cst_6 = arith.constant 1.000000e+00 : f32
    %14 = vector.broadcast %cst_6 : f32 to vector<16x64xf32>
    %15 = arith.addf %14, %13 : vector<16x64xf32>
    %16 = arith.divf %14, %15 : vector<16x64xf32>
    %17 = arith.mulf %10, %16 : vector<16x64xf32>
    %18 = vector.extract_strided_slice %7 {offsets = [0, 128], sizes = [16, 128], strides = [1, 1]} : vector<16x384xf32> to vector<16x128xf32>
    %19 = vector.extract_strided_slice %18 {offsets = [0, 0], sizes = [16, 64], strides = [1, 1]} : vector<16x128xf32> to vector<16x64xf32>
    %20 = math.tanh %19 : vector<16x64xf32>
    %21 = vector.extract_strided_slice %18 {offsets = [0, 64], sizes = [16, 64], strides = [1, 1]} : vector<16x128xf32> to vector<16x64xf32>
    %22 = arith.negf %21 : vector<16x64xf32>
    %23 = math.exp %22 : vector<16x64xf32>
    %cst_7 = arith.constant 1.000000e+00 : f32
    %24 = vector.broadcast %cst_7 : f32 to vector<16x64xf32>
    %25 = arith.addf %24, %23 : vector<16x64xf32>
    %26 = arith.divf %24, %25 : vector<16x64xf32>
    %27 = arith.mulf %20, %26 : vector<16x64xf32>
    %28 = vector.extract_strided_slice %7 {offsets = [0, 256], sizes = [16, 128], strides = [1, 1]} : vector<16x384xf32> to vector<16x128xf32>
    %29 = vector.extract_strided_slice %28 {offsets = [0, 0], sizes = [16, 64], strides = [1, 1]} : vector<16x128xf32> to vector<16x64xf32>
    %30 = math.tanh %29 : vector<16x64xf32>
    %31 = vector.extract_strided_slice %28 {offsets = [0, 64], sizes = [16, 64], strides = [1, 1]} : vector<16x128xf32> to vector<16x64xf32>
    %32 = arith.negf %31 : vector<16x64xf32>
    %33 = math.exp %32 : vector<16x64xf32>
    %cst_8 = arith.constant 1.000000e+00 : f32
    %34 = vector.broadcast %cst_8 : f32 to vector<16x64xf32>
    %35 = arith.addf %34, %33 : vector<16x64xf32>
    %36 = arith.divf %34, %35 : vector<16x64xf32>
    %37 = arith.mulf %30, %36 : vector<16x64xf32>
    %38 = tpu.concatenate %17, %27, %37 in 0 : vector<16x64xf32>, vector<16x64xf32>, vector<16x64xf32> -> vector<48x64xf32>
    %c0_9 = arith.constant 0 : index
    %c0_10 = arith.constant 0 : index
    %39 = vector.load %arg4[%c0_9, %c0_10] : memref<16x48xf32, #tpu.memory_space<vmem>>, vector<16x48xf32>
    %cst_11 = arith.constant dense<0.000000e+00> : vector<16x64xf32>
    %40 = tpu.matmul %39, %38, %cst_11 {dimension_numbers = #tpu.dot_dimension_numbers<[1], [0], [0], [1], [0, 0, 1, 1], [], []>} : vector<16x48xf32>, vector<48x64xf32>, vector<16x64xf32> -> vector<16x64xf32>
    %41 = arith.addf %2, %40 : vector<16x64xf32>
    %c0_12 = arith.constant 0 : index
    %c0_13 = arith.constant 0 : index
    %42 = vector.load %arg5[%c0_12, %c0_13] : memref<16x1xf32, #tpu.memory_space<vmem>>, vector<16x1xf32>
    %43 = vector.broadcast %42 : vector<16x1xf32> to vector<16x64xf32>
    %44 = arith.addf %41, %43 : vector<16x64xf32>
    %cst_14 = arith.constant 0.000000e+00 : f32
    %45 = vector.broadcast %cst_14 : f32 to vector<16x64xf32>
    %46 = arith.maximumf %44, %45 : vector<16x64xf32>
    %c0_15 = arith.constant 0 : index
    %c0_16 = arith.constant 0 : index
    %c0_17 = arith.constant 0 : index
    %47 = vector.load %arg6[%c0_15, %c0_16, %c0_17] : memref<1x16x64xf32, #tpu.memory_space<vmem>>, vector<1x16x64xf32>
    %48 = vector.shape_cast %47 : vector<1x16x64xf32> to vector<16x64xf32>
    %49 = vector.shape_cast %46 : vector<16x64xf32> to vector<1x16x64xf32>
    tpu.vector_store %arg6[%c0_15, %c0_16, %c0_17], %49 {strides = array<i32>} : memref<1x16x64xf32, #tpu.memory_space<vmem>>, vector<1x16x64xf32>,
    return
  }
  func.func @transform_0(%arg0: i32) -> (i32, i32, i32) {
    %c0_i32 = arith.constant 0 : i32
    %c0_i32_0 = arith.constant 0 : i32
    %c0_i32_1 = arith.constant 0 : i32
    return %arg0, %c0_i32, %c0_i32_0 : i32, i32, i32
  }
  func.func @transform_1(%arg0: i32) -> (i32, i32) {
    %c0_i32 = arith.constant 0 : i32
    %c0_i32_0 = arith.constant 0 : i32
    %c0_i32_1 = arith.constant 0 : i32
    return %c0_i32, %c0_i32_0 : i32, i32
  }
  func.func @transform_2(%arg0: i32) -> (i32, i32) {
    %c0_i32 = arith.constant 0 : i32
    %c0_i32_0 = arith.constant 0 : i32
    %c0_i32_1 = arith.constant 0 : i32
    return %c0_i32, %c0_i32_0 : i32, i32
  }
  func.func @transform_3(%arg0: i32) -> (i32, i32) {
    %c0_i32 = arith.constant 0 : i32
    %c0_i32_0 = arith.constant 0 : i32
    %c0_i32_1 = arith.constant 0 : i32
    return %c0_i32, %c0_i32_0 : i32, i32
  }
  func.func @transform_4(%arg0: i32) -> (i32, i32) {
    %c0_i32 = arith.constant 0 : i32
    %c0_i32_0 = arith.constant 0 : i32
    %c0_i32_1 = arith.constant 0 : i32
    return %c0_i32, %c0_i32_0 : i32, i32
  }
  func.func @transform_5(%arg0: i32) -> (i32, i32, i32) {
    %c0_i32 = arith.constant 0 : i32
    %c0_i32_0 = arith.constant 0 : i32
    %c0_i32_1 = arith.constant 0 : i32
    return %arg0, %c0_i32, %c0_i32_0 : i32, i32, i32
  }
}

</mosaic_0001>

<llo_original>
// kernel: multi_gtu_forward.1
$region0: #{multi_gtu_forward.1}
  #allocation0 [shape = 'u32[]', space=smem, size = 0x4, offset = 0x4, fixed_abs, tag = 'smem constant byte address 0x4 - core index']
  #allocation1 [shape = 'u32[144,128]{1,0:T(1,128)}', space=vmem, size = 0x12000, scoped, tag = 'internal scratch']
  %s0 = inlined_call_operand.vmem [shape: f32[2,16,448], index: 0, kind: input, shape index: {}]
  %s1 = inlined_call_operand.hbm [shape: f32[448,384], index: 1, kind: input, shape index: {}]
  %s2 = inlined_call_operand.vmem [shape: f32[1,384], index: 2, kind: input, shape index: {}]
  %s3 = inlined_call_operand.vmem [shape: f32[16,48], index: 3, kind: input, shape index: {}]
  %s4 = inlined_call_operand.vmem [shape: f32[16,1], index: 4, kind: input, shape index: {}]
  %s5 = inlined_call_operand.vmem [shape: f32[2,16,64], index: 5, kind: output, shape index: {}]
  %s6 = sld [smem:[#allocation0]]
  $region57: #{multi_gtu_forward.1} parent=0
    _
  %s8 = ssub.s32 1, %s6
  %s9 = scalar_select 0, %s8, %s6
  $region1: #{multi_gtu_forward.1} parent=0
    #allocation2 [shape = 'u8[688128]{0}', space=vmem, size = 0xa8000, scoped, tag = 'input window, operand 1, single buffered']
    #allocation3 [shape = 's32[2]{0}', space=sflag, size = 0x8, scoped, tag = 'scoped memory for multi_gtu_forward.1']
    %10 = vsyncpa [#allocation3], 0
    loop: start=0, step=1, limit=4
    $region2: #{multi_gtu_forward.1} parent=1 // loop_pre_header
      _
    $region3: #{multi_gtu_forward.1} parent=1 // loop_header
      %s12 = sphi 0, %s16
      %p13 = scmp.ge.s32.totalorder %s12, 4
      %s22 = sphi 0, %s24
      %s25 = sphi 0, %s22
      %s26 = sphi 0, %s25
      %s42 = sphi 0, %s26
      %s46 = sphi 0, %s46
      %s48 = sphi 0, %s46
      %s49 = sphi 0, %s48
      %s63 = sphi 0, %s49
      %s67 = sphi 0, %s67
      %s69 = sphi 0, %s67
      %s70 = sphi 0, %s69
      %s84 = sphi 0, %s70
      %s88 = sphi 0, %s88
      %s90 = sphi 0, %s88
      %s91 = sphi 0, %s90
      %s105 = sphi 0, %s91
      %s109 = sphi 0, %s109
      %s111 = sphi 0, %s109
      %s112 = sphi 0, %s111
      %s126 = sphi 0, %s112
      %s132 = sphi 0, %s134
      %s135 = sphi 0, %s132
      %s136 = sphi 0, %s135
      %s152 = sphi 0, %s136
    $region4: #{multi_gtu_forward.1} parent=1 // loop_header_branch
      %15 = sbr.rel (%p13) target = $region8
    $region5: #{multi_gtu_forward.1} parent=1 // loop_body
      %s17 = ssub.s32 %s12, 1
      %s18 = ssub.s32 %s12, 2
      %s19 = sadd.s32 %s12, 1
      %s20 = ssub.s32 %s12, %s19
      %p21 = scmp.eq.s32.totalorder %s20, 0
      %s23 = sadd.s32 %s22, 1
      %s24 = scalar_select %p21, %s22, %s23
      %p27 = pneg %p21
      %p28 = scmp.eq.s32.totalorder %s12, 1
      %p29 = por %p27, %p28
      %p30 = scmp.ne.s32.totalorder %s22, %s25
      %p31 = scmp.eq.s32.totalorder %s12, 0
      %p32 = por %p30, %p31
      %p33 = scmp.ne.s32.totalorder %s22, %s25
      %p34 = scmp.eq.s32.totalorder %s17, 1
      %p35 = por %p33, %p34
      %p36 = scmp.ne.s32.totalorder %s25, %s26
      %p37 = scmp.eq.s32.totalorder %s17, 0
      %p38 = por %p36, %p37
      %p39 = scmp.ne.s32.totalorder %s25, %s26
      %p40 = scmp.eq.s32.totalorder %s18, 1
      %p41 = por %p39, %p40
      %p43 = scmp.ne.s32.totalorder %s26, %s42
      %p44 = scmp.eq.s32.totalorder %s18, 0
      %p45 = por %p43, %p44
      %s47 = sadd.s32 %s46, 1
      %p50 = scmp.eq.s32.totalorder %s12, 1
      %p51 = scmp.ne.s32.totalorder %s46, %s48
      %p52 = scmp.eq.s32.totalorder %s12, 0
      %p53 = por %p51, %p52
      %p54 = scmp.ne.s32.totalorder %s46, %s48
      %p55 = scmp.eq.s32.totalorder %s17, 1
      %p56 = por %p54, %p55
      %p57 = scmp.ne.s32.totalorder %s48, %s49
      %p58 = scmp.eq.s32.totalorder %s17, 0
      %p59 = por %p57, %p58
      %p60 = scmp.ne.s32.totalorder %s48, %s49
      %p61 = scmp.eq.s32.totalorder %s18, 1
      %p62 = por %p60, %p61
      %p64 = scmp.ne.s32.totalorder %s49, %s63
      %p65 = scmp.eq.s32.totalorder %s18, 0
      %p66 = por %p64, %p65
      %s68 = sadd.s32 %s67, 1
      %p71 = scmp.eq.s32.totalorder %s12, 1
      %p72 = scmp.ne.s32.totalorder %s67, %s69
      %p73 = scmp.eq.s32.totalorder %s12, 0
      %p74 = por %p72, %p73
      %p75 = scmp.ne.s32.totalorder %s67, %s69
      %p76 = scmp.eq.s32.totalorder %s17, 1
      %p77 = por %p75, %p76
      %p78 = scmp.ne.s32.totalorder %s69, %s70
      %p79 = scmp.eq.s32.totalorder %s17, 0
      %p80 = por %p78, %p79
      %p81 = scmp.ne.s32.totalorder %s69, %s70
      %p82 = scmp.eq.s32.totalorder %s18, 1
      %p83 = por %p81, %p82
      %p85 = scmp.ne.s32.totalorder %s70, %s84
      %p86 = scmp.eq.s32.totalorder %s18, 0
      %p87 = por %p85, %p86
      %s89 = sadd.s32 %s88, 1
      %p92 = scmp.eq.s32.totalorder %s12, 1
      %p93 = scmp.ne.s32.totalorder %s88, %s90
      %p94 = scmp.eq.s32.totalorder %s12, 0
      %p95 = por %p93, %p94
      %p96 = scmp.ne.s32.totalorder %s88, %s90
      %p97 = scmp.eq.s32.totalorder %s17, 1
      %p98 = por %p96, %p97
      %p99 = scmp.ne.s32.totalorder %s90, %s91
      %p100 = scmp.eq.s32.totalorder %s17, 0
      %p101 = por %p99, %p100
      %p102 = scmp.ne.s32.totalorder %s90, %s91
      %p103 = scmp.eq.s32.totalorder %s18, 1
      %p104 = por %p102, %p103
      %p106 = scmp.ne.s32.totalorder %s91, %s105
      %p107 = scmp.eq.s32.totalorder %s18, 0
      %p108 = por %p106, %p107
      %s110 = sadd.s32 %s109, 1
      %p113 = scmp.eq.s32.totalorder %s12, 1
      %p114 = scmp.ne.s32.totalorder %s109, %s111
      %p115 = scmp.eq.s32.totalorder %s12, 0
      %p116 = por %p114, %p115
      %p117 = scmp.ne.s32.totalorder %s109, %s111
      %p118 = scmp.eq.s32.totalorder %s17, 1
      %p119 = por %p117, %p118
      %p120 = scmp.ne.s32.totalorder %s111, %s112
      %p121 = scmp.eq.s32.totalorder %s17, 0
      %p122 = por %p120, %p121
      %p123 = scmp.ne.s32.totalorder %s111, %s112
      %p124 = scmp.eq.s32.totalorder %s18, 1
      %p125 = por %p123, %p124
      %p127 = scmp.ne.s32.totalorder %s112, %s126
      %p128 = scmp.eq.s32.totalorder %s18, 0
      %p129 = por %p127, %p128
      %s130 = ssub.s32 %s12, %s19
      %p131 = scmp.eq.s32.totalorder %s130, 0
      %s133 = sadd.s32 %s132, 1
      %s134 = scalar_select %p131, %s132, %s133
      %p137 = pneg %p131
      %p138 = scmp.eq.s32.totalorder %s12, 1
      %p139 = por %p137, %p138
      %p140 = scmp.ne.s32.totalorder %s132, %s135
      %p141 = scmp.eq.s32.totalorder %s12, 0
      %p142 = por %p140, %p141
      %p143 = scmp.ne.s32.totalorder %s132, %s135
      %p144 = scmp.eq.s32.totalorder %s17, 1
      %p145 = por %p143, %p144
      %p146 = scmp.ne.s32.totalorder %s135, %s136
      %p147 = scmp.eq.s32.totalorder %s17, 0
      %p148 = por %p146, %p147
      %p149 = scmp.ne.s32.totalorder %s135, %s136
      %p150 = scmp.eq.s32.totalorder %s18, 1
      %p151 = por %p149, %p150
      %p153 = scmp.ne.s32.totalorder %s136, %s152
      %p154 = scmp.eq.s32.totalorder %s18, 0
      %p155 = por %p153, %p154
      %p156 = scmp.le.s32.totalorder 1, %s12
      %p157 = scmp.lt.s32.totalorder %s12, 3
      %p158 = pnand %p156, %p157
      %p159 = pneg %p158
      // Predicated region
      $region9: #{multi_gtu_forward.1} parent=5 // pred_check
        _
      $region10: #{multi_gtu_forward.1} parent=5 // pred_check_branch
        %161 = sbr.rel (%p158) target = $region12
      $region11: #{multi_gtu_forward.1} parent=5 // pred_region
        %s162 = ssub.s32 %s12, 1
        // Predicated region
        $region13: #{multi_gtu_forward.1} parent=11 // pred_check
          %p163 = pneg %p59
        $region14: #{multi_gtu_forward.1} parent=11 // pred_check_branch
          %165 = sbr.rel (%p163) target = $region16
        $region15: #{multi_gtu_forward.1} parent=11 // pred_region
          %s167 = ssub.s32 21504, 21504
          %168 = vsyncadd [#allocation3], %s167
          %s169 = sshll.u32 [#allocation2], 4
          %s170 = int_to_ptr.vmem [resolvable:$true] %s169
          %175 = dma.hbm_to_vmem [thread:$0]  %s1, 21504, %s170, [#allocation3], 384, 384, 24
        $region16: #{multi_gtu_forward.1} parent=11 // pred_fallthru
          _
        // Predicated region
        $region17: #{multi_gtu_forward.1} parent=11 // pred_check
          %p176 = pneg %p80
        $region18: #{multi_gtu_forward.1} parent=11 // pred_check_branch
          %178 = sbr.rel (%p176) target = $region20
        $region19: #{multi_gtu_forward.1} parent=11 // pred_region
          _
        $region20: #{multi_gtu_forward.1} parent=11 // pred_fallthru
          _
        // Predicated region
        $region21: #{multi_gtu_forward.1} parent=11 // pred_check
          %p179 = pneg %p101
        $region22: #{multi_gtu_forward.1} parent=11 // pred_check_branch
          %181 = sbr.rel (%p179) target = $region24
        $region23: #{multi_gtu_forward.1} parent=11 // pred_region
          _
        $region24: #{multi_gtu_forward.1} parent=11 // pred_fallthru
          _
        // Predicated region
        $region25: #{multi_gtu_forward.1} parent=11 // pred_check
          %p182 = pneg %p122
        $region26: #{multi_gtu_forward.1} parent=11 // pred_check_branch
          %184 = sbr.rel (%p182) target = $region28
        $region27: #{multi_gtu_forward.1} parent=11 // pred_region
          _
        $region28: #{multi_gtu_forward.1} parent=11 // pred_fallthru
          _
      $region12: #{multi_gtu_forward.1} parent=5 // pred_fallthru
        _
      %p185 = scmp.lt.s32.totalorder %s12, 2
      // Predicated region
      $region29: #{multi_gtu_forward.1} parent=5 // pred_check
        %p186 = pneg %p185
      $region30: #{multi_gtu_forward.1} parent=5 // pred_check_branch
        %188 = sbr.rel (%p186) target = $region32
      $region31: #{multi_gtu_forward.1} parent=5 // pred_region
        // Predicated region
        $region33: #{multi_gtu_forward.1} parent=31 // pred_check
          %p189 = pneg %p32
        $region34: #{multi_gtu_forward.1} parent=31 // pred_check_branch
          %191 = sbr.rel (%p189) target = $region36
        $region35: #{multi_gtu_forward.1} parent=31 // pred_region
          %p192 = scmp.lt.s32.totalorder %s12, 1
          %s193 = scalar_select %p192, %s12, 1
          %s194 = smul.addr %s193, 8
          %s195 = smul.addr %s194, 8
          %s196 = scalar_lea.vmem %s0, %s195
        $region36: #{multi_gtu_forward.1} parent=31 // pred_fallthru
          _
      $region32: #{multi_gtu_forward.1} parent=5 // pred_fallthru
        _
      %p197 = scmp.le.s32.totalorder 1, %s12
      %p198 = scmp.lt.s32.totalorder %s12, 3
      %p199 = pnand %p197, %p198
      %p200 = pneg %p199
      // Predicated region
      $region37: #{multi_gtu_forward.1} parent=5 // pred_check
        _
      $region38: #{multi_gtu_forward.1} parent=5 // pred_check_branch
        %202 = sbr.rel (%p199) target = $region40
      $region39: #{multi_gtu_forward.1} parent=5 // pred_region
        %s203 = ssub.s32 %s12, 1
        // Predicated region
        $region41: #{multi_gtu_forward.1} parent=39 // pred_check
          %p204 = pneg %p59
        $region42: #{multi_gtu_forward.1} parent=39 // pred_check_branch
          %206 = sbr.rel (%p204) target = $region44
        $region43: #{multi_gtu_forward.1} parent=39 // pred_region
          %207 = dma.done [#allocation3], 21504
        $region44: #{multi_gtu_forward.1} parent=39 // pred_fallthru
          _
        %p208 = scmp.lt.s32.totalorder %s17, 1
        %s209 = scalar_select %p208, %s17, 1
        %s210 = smul.addr %s209, 8
        %s211 = smul.addr %s210, 8
        %s212 = scalar_lea.vmem %s0, %s211
        %p213 = pneg %p38
        %p214 = pneg %p35
        %p215 = pneg %p59
        %p216 = pneg %p56
        %p217 = pneg %p80
        %p218 = pneg %p77
        %p219 = pneg %p101
        %p220 = pneg %p98
        %p221 = pneg %p122
        %p222 = pneg %p119
        %p223 = pneg %p148
        %p224 = pneg %p145
        %p225 = scmp.lt.s32.totalorder %s17, 1
        %s226 = scalar_select %p225, %s17, 1
        %s227 = smul.addr %s226, 2
        %s228 = smul.addr %s227, 8
        %s229 = scalar_lea.vmem %s5, %s228
        %p230 = scmp.lt.s32.totalorder %s17, 1
        %s231 = scalar_select %p230, %s17, 1
        %s232 = smul.addr %s231, 8
        %s233 = smul.addr %s232, 8
        %s234 = scalar_lea.vmem %s0, %s233
        %p235 = scmp.lt.s32.totalorder %s17, 1
        %s236 = scalar_select %p235, %s17, 1
        %s237 = smul.addr %s236, 2
        %s238 = smul.addr %s237, 8
        %s239 = scalar_lea.vmem %s5, %s238
        %v240 = vld [vmem:[%s234] sm:$0xff]
        %v241 = vld [vmem:[%s234 + $0x8] sm:$0xff]
        %v242 = vld [vmem:[%s234 + $0x10] sm:$0xff]
        %v243 = vld [vmem:[%s234 + $0x18] sm:$0xff]
        %v244 = vld [vmem:[%s234 + $0x20] sm:$0xff]
        %v245 = vld [vmem:[%s234 + $0x28] sm:$0xff]
        %v246 = vld [vmem:[%s234 + $0x30] sm:$0xff]
        %v247 = vld [vmem:[%s234 + $0x38] sm:$0xff]
        %v248 = vld [vmem:[#allocation2] sm:$0xff]
        %v249 = vld [vmem:[#allocation2 + $0x8] sm:$0xff]
        %v250 = vld [vmem:[#allocation2 + $0x10] sm:$0xff]
        %v251 = vld [vmem:[#allocation2 + $0x18] sm:$0xff]
        %v252 = vld [vmem:[#allocation2 + $0x20] sm:$0xff]
        %v253 = vld [vmem:[#allocation2 + $0x28] sm:$0xff]
        %v254 = vld [vmem:[#allocation2 + $0x30] sm:$0xff]
        %v255 = vld [vmem:[#allocation2 + $0x38] sm:$0xff]
        %v256 = vld [vmem:[#allocation2 + $0x40] sm:$0xff]
        %v257 = vld [vmem:[#allocation2 + $0x48] sm:$0xff]
        %v258 = vld [vmem:[#allocation2 + $0x50] sm:$0xff]
        %v259 = vld [vmem:[#allocation2 + $0x58] sm:$0xff]
        %v260 = vld [vmem:[#allocation2 + $0x60] sm:$0xff]
        %v261 = vld [vmem:[#allocation2 + $0x68] sm:$0xff]
        %v262 = vld [vmem:[#allocation2 + $0x70] sm:$0xff]
        %v263 = vld [vmem:[#allocation2 + $0x78] sm:$0xff]
        %v264 = vld [vmem:[#allocation2 + $0x80] sm:$0xff]
        %v265 = vld [vmem:[#allocation2 + $0x88] sm:$0xff]
        %v266 = vld [vmem:[#allocation2 + $0x90] sm:$0xff]
        %v267 = vld [vmem:[#allocation2 + $0x98] sm:$0xff]
        %v268 = vld [vmem:[#allocation2 + $0xa0] sm:$0xff]
        %v269 = vld [vmem:[#allocation2 + $0xa8] sm:$0xff]
        %v270 = vld [vmem:[#allocation2 + $0xb0] sm:$0xff]
        %v271 = vld [vmem:[#allocation2 + $0xb8] sm:$0xff]
        %v272 = vld [vmem:[#allocation2 + $0xc0] sm:$0xff]
        %v273 = vld [vmem:[#allocation2 + $0xc8] sm:$0xff]
        %v274 = vld [vmem:[#allocation2 + $0xd0] sm:$0xff]
        %v275 = vld [vmem:[#allocation2 + $0xd8] sm:$0xff]
        %v276 = vld [vmem:[#allocation2 + $0xe0] sm:$0xff]
        %v277 = vld [vmem:[#allocation2 + $0xe8] sm:$0xff]
        %v278 = vld [vmem:[#allocation2 + $0xf0] sm:$0xff]
        %v279 = vld [vmem:[#allocation2 + $0xf8] sm:$0xff]
        %v280 = vld [vmem:[#allocation2 + $0x100] sm:$0xff]
        %v281 = vld [vmem:[#allocation2 + $0x108] sm:$0xff]
        %v282 = vld [vmem:[#allocation2 + $0x110] sm:$0xff]
        %v283 = vld [vmem:[#allocation2 + $0x118] sm:$0xff]
        %v284 = vld [vmem:[#allocation2 + $0x120] sm:$0xff]
        %v285 = vld [vmem:[#allocation2 + $0x128] sm:$0xff]
        %v286 = vld [vmem:[#allocation2 + $0x130] sm:$0xff]
        %v287 = vld [vmem:[#allocation2 + $0x138] sm:$0xff]
        %v288 = vld [vmem:[#allocation2 + $0x140] sm:$0xff]
        %v289 = vld [vmem:[#allocation2 + $0x148] sm:$0xff]
        %v290 = vld [vmem:[#allocation2 + $0x150] sm:$0xff]
        %v291 = vld [vmem:[#allocation2 + $0x158] sm:$0xff]
        %v292 = vld [vmem:[#allocation2 + $0x160] sm:$0xff]
        %v293 = vld [vmem:[#allocation2 + $0x168] sm:$0xff]
        %v294 = vld [vmem:[#allocation2 + $0x170] sm:$0xff]
        %v295 = vld [vmem:[#allocation2 + $0x178] sm:$0xff]
        %v296 = vld [vmem:[#allocation2 + $0x180] sm:$0xff]
        %v297 = vld [vmem:[#allocation2 + $0x188] sm:$0xff]
        %v298 = vld [vmem:[#allocation2 + $0x190] sm:$0xff]
        %v299 = vld [vmem:[#allocation2 + $0x198] sm:$0xff]
        %v300 = vld [vmem:[#allocation2 + $0x1a0] sm:$0xff]
        %v301 = vld [vmem:[#allocation2 + $0x1a8] sm:$0xff]
        %v302 = vld [vmem:[#allocation2 + $0x1b0] sm:$0xff]
        %v303 = vld [vmem:[#allocation2 + $0x1b8] sm:$0xff]
        %v304 = vld [vmem:[#allocation2 + $0x1c0] sm:$0xff]
        %v305 = vld [vmem:[#allocation2 + $0x1c8] sm:$0xff]
        %v306 = vld [vmem:[#allocation2 + $0x1d0] sm:$0xff]
        %v307 = vld [vmem:[#allocation2 + $0x1d8] sm:$0xff]
        %v308 = vld [vmem:[#allocation2 + $0x1e0] sm:$0xff]
        %v309 = vld [vmem:[#allocation2 + $0x1e8] sm:$0xff]
        %v310 = vld [vmem:[#allocation2 + $0x1f0] sm:$0xff]
        %v311 = vld [vmem:[#allocation2 + $0x1f8] sm:$0xff]
        %v312 = vld [vmem:[#allocation2 + $0x200] sm:$0xff]
        %v313 = vld [vmem:[#allocation2 + $0x208] sm:$0xff]
        %v314 = vld [vmem:[#allocation2 + $0x210] sm:$0xff]
        %v315 = vld [vmem:[#allocation2 + $0x218] sm:$0xff]
        %v316 = vld [vmem:[#allocation2 + $0x220] sm:$0xff]
        %v317 = vld [vmem:[#allocation2 + $0x228] sm:$0xff]
        %v318 = vld [vmem:[#allocation2 + $0x230] sm:$0xff]
        %v319 = vld [vmem:[#allocation2 + $0x238] sm:$0xff]
        %v320 = vld [vmem:[#allocation2 + $0x240] sm:$0xff]
        %v321 = vld [vmem:[#allocation2 + $0x248] sm:$0xff]
        %v322 = vld [vmem:[#allocation2 + $0x250] sm:$0xff]
        %v323 = vld [vmem:[#allocation2 + $0x258] sm:$0xff]
        %v324 = vld [vmem:[#allocation2 + $0x260] sm:$0xff]
        %v325 = vld [vmem:[#allocation2 + $0x268] sm:$0xff]
        %v326 = vld [vmem:[#allocation2 + $0x270] sm:$0xff]
        %v327 = vld [vmem:[#allocation2 + $0x278] sm:$0xff]
        %v328 = vld [vmem:[#allocation2 + $0x280] sm:$0xff]
        %v329 = vld [vmem:[#allocation2 + $0x288] sm:$0xff]
        %v330 = vld [vmem:[#allocation2 + $0x290] sm:$0xff]
        %v331 = vld [vmem:[#allocation2 + $0x298] sm:$0xff]
        %v332 = vld [vmem:[#allocation2 + $0x2a0] sm:$0xff]
        %v333 = vld [vmem:[#allocation2 + $0x2a8] sm:$0xff]
        %v334 = vld [vmem:[#allocation2 + $0x2b0] sm:$0xff]
        %v335 = vld [vmem:[#allocation2 + $0x2b8] sm:$0xff]
        %v336 = vld [vmem:[#allocation2 + $0x2c0] sm:$0xff]
        %v337 = vld [vmem:[#allocation2 + $0x2c8] sm:$0xff]
        %v338 = vld [vmem:[#allocation2 + $0x2d0] sm:$0xff]
        %v339 = vld [vmem:[#allocation2 + $0x2d8] sm:$0xff]
        %v340 = vld [vmem:[#allocation2 + $0x2e0] sm:$0xff]
        %v341 = vld [vmem:[#allocation2 + $0x2e8] sm:$0xff]
        %v342 = vld [vmem:[#allocation2 + $0x2f0] sm:$0xff]
        %v343 = vld [vmem:[#allocation2 + $0x2f8] sm:$0xff]
        %v344 = vld [vmem:[#allocation2 + $0x300] sm:$0xff]
        %v345 = vld [vmem:[#allocation2 + $0x308] sm:$0xff]
        %v346 = vld [vmem:[#allocation2 + $0x310] sm:$0xff]
        %v347 = vld [vmem:[#allocation2 + $0x318] sm:$0xff]
        %v348 = vld [vmem:[#allocation2 + $0x320] sm:$0xff]
        %v349 = vld [vmem:[#allocation2 + $0x328] sm:$0xff]
        %v350 = vld [vmem:[#allocation2 + $0x330] sm:$0xff]
        %v351 = vld [vmem:[#allocation2 + $0x338] sm:$0xff]
        %v352 = vld [vmem:[#allocation2 + $0x340] sm:$0xff]
        %v353 = vld [vmem:[#allocation2 + $0x348] sm:$0xff]
        %v354 = vld [vmem:[#allocation2 + $0x350] sm:$0xff]
        %v355 = vld [vmem:[#allocation2 + $0x358] sm:$0xff]
        %v356 = vld [vmem:[#allocation2 + $0x360] sm:$0xff]
        %v357 = vld [vmem:[#allocation2 + $0x368] sm:$0xff]
        %v358 = vld [vmem:[#allocation2 + $0x370] sm:$0xff]
        %v359 = vld [vmem:[#allocation2 + $0x378] sm:$0xff]
        %v360 = vld [vmem:[#allocation2 + $0x380] sm:$0xff]
        %v361 = vld [vmem:[#allocation2 + $0x388] sm:$0xff]
        %v362 = vld [vmem:[#allocation2 + $0x390] sm:$0xff]
        %v363 = vld [vmem:[#allocation2 + $0x398] sm:$0xff]
        %v364 = vld [vmem:[#allocation2 + $0x3a0] sm:$0xff]
        %v365 = vld [vmem:[#allocation2 + $0x3a8] sm:$0xff]
        %v366 = vld [vmem:[#allocation2 + $0x3b0] sm:$0xff]
        %v367 = vld [vmem:[#allocation2 + $0x3b8] sm:$0xff]
        %v368 = vld [vmem:[#allocation2 + $0x3c0] sm:$0xff]
        %v369 = vld [vmem:[#allocation2 + $0x3c8] sm:$0xff]
        %v370 = vld [vmem:[#allocation2 + $0x3d0] sm:$0xff]
        %v371 = vld [vmem:[#allocation2 + $0x3d8] sm:$0xff]
        %v372 = vld [vmem:[#allocation2 + $0x3e0] sm:$0xff]
        %v373 = vld [vmem:[#allocation2 + $0x3e8] sm:$0xff]
        %v374 = vld [vmem:[#allocation2 + $0x3f0] sm:$0xff]
        %v375 = vld [vmem:[#allocation2 + $0x3f8] sm:$0xff]
        %v376 = vld [vmem:[#allocation2 + $0x400] sm:$0xff]
        %v377 = vld [vmem:[#allocation2 + $0x408] sm:$0xff]
        %v378 = vld [vmem:[#allocation2 + $0x410] sm:$0xff]
        %v379 = vld [vmem:[#allocation2 + $0x418] sm:$0xff]
        %v380 = vld [vmem:[#allocation2 + $0x420] sm:$0xff]
        %v381 = vld [vmem:[#allocation2 + $0x428] sm:$0xff]
        %v382 = vld [vmem:[#allocation2 + $0x430] sm:$0xff]
        %v383 = vld [vmem:[#allocation2 + $0x438] sm:$0xff]
        %v384 = vld [vmem:[#allocation2 + $0x440] sm:$0xff]
        %v385 = vld [vmem:[#allocation2 + $0x448] sm:$0xff]
        %v386 = vld [vmem:[#allocation2 + $0x450] sm:$0xff]
        %v387 = vld [vmem:[#allocation2 + $0x458] sm:$0xff]
        %v388 = vld [vmem:[#allocation2 + $0x460] sm:$0xff]
        %v389 = vld [vmem:[#allocation2 + $0x468] sm:$0xff]
        %v390 = vld [vmem:[#allocation2 + $0x470] sm:$0xff]
        %v391 = vld [vmem:[#allocation2 + $0x478] sm:$0xff]
        %v392 = vld [vmem:[#allocation2 + $0x480] sm:$0xff]
        %v393 = vld [vmem:[#allocation2 + $0x488] sm:$0xff]
        %v394 = vld [vmem:[#allocation2 + $0x490] sm:$0xff]
        %v395 = vld [vmem:[#allocation2 + $0x498] sm:$0xff]
        %v396 = vld [vmem:[#allocation2 + $0x4a0] sm:$0xff]
        %v397 = vld [vmem:[#allocation2 + $0x4a8] sm:$0xff]
        %v398 = vld [vmem:[#allocation2 + $0x4b0] sm:$0xff]
        %v399 = vld [vmem:[#allocation2 + $0x4b8] sm:$0xff]
        %v400 = vld [vmem:[#allocation2 + $0x4c0] sm:$0xff]
        %v401 = vld [vmem:[#allocation2 + $0x4c8] sm:$0xff]
        %v402 = vld [vmem:[#allocation2 + $0x4d0] sm:$0xff]
        %v403 = vld [vmem:[#allocation2 + $0x4d8] sm:$0xff]
        %v404 = vld [vmem:[#allocation2 + $0x4e0] sm:$0xff]
        %v405 = vld [vmem:[#allocation2 + $0x4e8] sm:$0xff]
        %v406 = vld [vmem:[#allocation2 + $0x4f0] sm:$0xff]
        %v407 = vld [vmem:[#allocation2 + $0x4f8] sm:$0xff]
        %v408 = vld [vmem:[#allocation2 + $0x500] sm:$0xff]
        %v409 = vld [vmem:[#allocation2 + $0x508] sm:$0xff]
        %v410 = vld [vmem:[#allocation2 + $0x510] sm:$0xff]
        %v411 = vld [vmem:[#allocation2 + $0x518] sm:$0xff]
        %v412 = vld [vmem:[#allocation2 + $0x520] sm:$0xff]
        %v413 = vld [vmem:[#allocation2 + $0x528] sm:$0xff]
        %v414 = vld [vmem:[#allocation2 + $0x530] sm:$0xff]
        %v415 = vld [vmem:[#allocation2 + $0x538] sm:$0xff]
        %v416 = vld [vmem:[%s2] sm:$0x7]
        %v418 = vlaneseq
        %v419 = vshrl.u32 %v418, 7
        %v420 = vsub.s32 0, %v419
        %v421 = vrot.slane %v416, %v420
        %v422 = vlaneseq
        %v423 = vshrl.u32 %v422, 7
        %v424 = vsub.s32 1, %v423
        %v425 = vrot.slane %v416, %v424
        %v426 = vlaneseq
        %v427 = vshrl.u32 %v426, 7
        %v428 = vsub.s32 2, %v427
        %v429 = vrot.slane %v416, %v428
        %vm433 = vcmask 523264
        %v435 = vsel %vm433, %v243, 0
        %v438 = vsel %vm433, %v247, 0
        %440 = vmatprep.subr.mxu0 %v249
        %441 = vmatpush1.msra.mxu0 %v248
        %442 = vmatprep.subr.mxu0 %v252
        %443 = vmatpush1.msra.mxu0 %v251
        %444 = vmatprep.subr.mxu0 %v255
        %445 = vmatpush1.msra.mxu0 %v254
        %446 = vmatprep.subr.mxu0 %v258
        %447 = vmatpush1.msra.mxu0 %v257
        %448 = vmatprep.subr.mxu0 %v261
        %449 = vmatpush1.msra.mxu0 %v260
        %450 = vmatprep.subr.mxu0 %v264
        %451 = vmatpush1.msra.mxu0 %v263
        %452 = vmatprep.subr.mxu0 %v267
        %453 = vmatpush1.msra.mxu0 %v266
        %454 = vmatprep.subr.mxu0 %v270
        %455 = vmatpush1.msra.mxu0 %v269
        %456 = vmatprep.subr.mxu0 %v273
        %457 = vmatpush1.msra.mxu0 %v272
        %458 = vmatprep.subr.mxu0 %v276
        %459 = vmatpush1.msra.mxu0 %v275
        %460 = vmatprep.subr.mxu0 %v279
        %461 = vmatpush1.msra.mxu0 %v278
        %462 = vmatprep.subr.mxu0 %v282
        %463 = vmatpush1.msra.mxu0 %v281
        %464 = vmatprep.subr.mxu0 %v285
        %465 = vmatpush1.msra.mxu0 %v284
        %466 = vmatprep.subr.mxu0 %v288
        %467 = vmatpush1.msra.mxu0 %v287
        %468 = vmatprep.subr.mxu0 %v291
        %469 = vmatpush1.msra.mxu0 %v290
        %470 = vmatprep.subr.mxu0 %v294
        %471 = vmatpush1.msra.mxu0 %v293
        %472 = vmatprep.subr.mxu0 %v297
        %473 = vmatpush1.msra.mxu0 %v296
        %474 = vmatprep.subr.mxu0 %v300
        %475 = vmatpush1.msra.mxu0 %v299
        %476 = vmatprep.subr.mxu0 %v303
        %477 = vmatpush1.msra.mxu0 %v302
        %478 = vmatprep.subr.mxu0 %v306
        %479 = vmatpush1.msra.mxu0 %v305
        %480 = vmatprep.subr.mxu0 %v309
        %481 = vmatpush1.msra.mxu0 %v308
        %482 = vmatprep.subr.mxu0 %v312
        %483 = vmatpush1.msra.mxu0 %v311
        %484 = vmatprep.subr.mxu0 %v315
        %485 = vmatpush1.msra.mxu0 %v314
        %486 = vmatprep.subr.mxu0 %v318
        %487 = vmatpush1.msra.mxu0 %v317
        %488 = vmatprep.subr.mxu0 %v321
        %489 = vmatpush1.msra.mxu0 %v320
        %490 = vmatprep.subr.mxu0 %v324
        %491 = vmatpush1.msra.mxu0 %v323
        %492 = vmatprep.subr.mxu0 %v327
        %493 = vmatpush1.msra.mxu0 %v326
        %494 = vmatprep.subr.mxu0 %v330
        %495 = vmatpush1.msra.mxu0 %v329
        %496 = vmatprep.subr.mxu0 %v333
        %497 = vmatpush1.msra.mxu0 %v332
        %498 = vmatprep.subr.mxu0 %v336
        %499 = vmatpush1.msra.mxu0 %v335
        %500 = vmatprep.subr.mxu0 %v339
        %501 = vmatpush1.msra.mxu0 %v338
        %502 = vmatprep.subr.mxu0 %v342
        %503 = vmatpush1.msra.mxu0 %v341
        %504 = vmatprep.mubr.f32.mxu0 %v241
        %505 = vmatmul.mubr.f32.gmra.mrb[0].mxu0 %v240
        %v506 = vpop.f32.mrb[0].mxu0
        %v507 = vadd.f32 %v421, %v506
        %v508 = vpop.f32.mrb[0].mxu0
        %v509 = vadd.f32 %v425, %v508
        %510 = vmatprep.mubr.f32.mxu0 %v245
        %511 = vmatmul.mubr.f32.gmra.mrb[0].mxu0 %v244
        %v512 = vpop.f32.mrb[0].mxu0
        %v513 = vadd.f32 %v421, %v512
        %v514 = vpop.f32.mrb[0].mxu0
        %v515 = vadd.f32 %v425, %v514
        %516 = vdwg.mxu0
        %517 = vmatprep.subr.mxu0 %v345
        %518 = vmatpush1.msra.mxu0 %v344
        %519 = vmatprep.subr.mxu0 %v348
        %520 = vmatpush1.msra.mxu0 %v347
        %521 = vmatprep.subr.mxu0 %v351
        %522 = vmatpush1.msra.mxu0 %v350
        %523 = vmatprep.subr.mxu0 %v354
        %524 = vmatpush1.msra.mxu0 %v353
        %525 = vmatprep.subr.mxu0 %v357
        %526 = vmatpush1.msra.mxu0 %v356
        %527 = vmatprep.subr.mxu0 %v360
        %528 = vmatpush1.msra.mxu0 %v359
        %529 = vmatprep.subr.mxu0 %v363
        %530 = vmatpush1.msra.mxu0 %v362
        %531 = vmatprep.subr.mxu0 %v366
        %532 = vmatpush1.msra.mxu0 %v365
        %533 = vmatprep.subr.mxu0 %v369
        %534 = vmatpush1.msra.mxu0 %v368
        %535 = vmatprep.subr.mxu0 %v372
        %536 = vmatpush1.msra.mxu0 %v371
        %537 = vmatprep.subr.mxu0 %v375
        %538 = vmatpush1.msra.mxu0 %v374
        %539 = vmatprep.subr.mxu0 %v378
        %540 = vmatpush1.msra.mxu0 %v377
        %541 = vmatprep.subr.mxu0 %v381
        %542 = vmatpush1.msra.mxu0 %v380
        %543 = vmatprep.subr.mxu0 %v384
        %544 = vmatpush1.msra.mxu0 %v383
        %545 = vmatprep.subr.mxu0 %v387
        %546 = vmatpush1.msra.mxu0 %v386
        %547 = vmatprep.subr.mxu0 %v390
        %548 = vmatpush1.msra.mxu0 %v389
        %549 = vmatprep.subr.mxu0 %v393
        %550 = vmatpush1.msra.mxu0 %v392
        %551 = vmatprep.subr.mxu0 %v396
        %552 = vmatpush1.msra.mxu0 %v395
        %553 = vmatprep.subr.mxu0 %v399
        %554 = vmatpush1.msra.mxu0 %v398
        %555 = vmatprep.subr.mxu0 %v402
        %556 = vmatpush1.msra.mxu0 %v401
        %557 = vmatprep.subr.mxu0 %v405
        %558 = vmatpush1.msra.mxu0 %v404
        %559 = vmatprep.subr.mxu0 %v408
        %560 = vmatpush1.msra.mxu0 %v407
        %561 = vmatprep.subr.mxu0 %v411
        %562 = vmatpush1.msra.mxu0 %v410
        %563 = vmatprep.subr.mxu0 %v414
        %564 = vmatpush1.msra.mxu0 %v413
        %565 = vmatprep.subr.mxu0 0.0
        %566 = vmatpush1.msra.mxu0 0.0
        %567 = vmatprep.subr.mxu0 0.0
        %568 = vmatpush1.msra.mxu0 0.0
        %569 = vmatprep.subr.mxu0 0.0
        %570 = vmatpush1.msra.mxu0 0.0
        %571 = vmatprep.subr.mxu0 0.0
        %572 = vmatpush1.msra.mxu0 0.0
        %573 = vmatprep.subr.mxu0 0.0
        %574 = vmatpush1.msra.mxu0 0.0
        %575 = vmatprep.subr.mxu0 0.0
        %576 = vmatpush1.msra.mxu0 0.0
        %577 = vmatprep.subr.mxu0 0.0
        %578 = vmatpush1.msra.mxu0 0.0
        %579 = vmatprep.subr.mxu0 0.0
        %580 = vmatpush1.msra.mxu0 0.0
        %581 = vmatprep.mubr.f32.mxu0 %v435
        %582 = vmatmul.mubr.f32.gmra.mrb[0].mxu0 %v242
        %v583 = vpop.f32.mrb[0].mxu0
        %v584 = vadd.f32 %v507, %v583
        %v585 = vpop.f32.mrb[0].mxu0
        %v586 = vadd.f32 %v509, %v585
        %587 = vmatprep.mubr.f32.mxu0 %v438
        %588 = vmatmul.mubr.f32.gmra.mrb[0].mxu0 %v246
        %v589 = vpop.f32.mrb[0].mxu0
        %v590 = vadd.f32 %v513, %v589
        %v591 = vpop.f32.mrb[0].mxu0
        %v592 = vadd.f32 %v515, %v591
        %593 = vdwg.mxu0
        %594 = vmatprep.subr.mxu0 0.0
        %595 = vmatpush1.msra.mxu0 %v250
        %596 = vmatprep.subr.mxu0 0.0
        %597 = vmatpush1.msra.mxu0 %v253
        %598 = vmatprep.subr.mxu0 0.0
        %599 = vmatpush1.msra.mxu0 %v256
        %600 = vmatprep.subr.mxu0 0.0
        %601 = vmatpush1.msra.mxu0 %v259
        %602 = vmatprep.subr.mxu0 0.0
        %603 = vmatpush1.msra.mxu0 %v262
        %604 = vmatprep.subr.mxu0 0.0
        %605 = vmatpush1.msra.mxu0 %v265
        %606 = vmatprep.subr.mxu0 0.0
        %607 = vmatpush1.msra.mxu0 %v268
        %608 = vmatprep.subr.mxu0 0.0
        %609 = vmatpush1.msra.mxu0 %v271
        %610 = vmatprep.subr.mxu0 0.0
        %611 = vmatpush1.msra.mxu0 %v274
        %612 = vmatprep.subr.mxu0 0.0
        %613 = vmatpush1.msra.mxu0 %v277
        %614 = vmatprep.subr.mxu0 0.0
        %615 = vmatpush1.msra.mxu0 %v280
        %616 = vmatprep.subr.mxu0 0.0
        %617 = vmatpush1.msra.mxu0 %v283
        %618 = vmatprep.subr.mxu0 0.0
        %619 = vmatpush1.msra.mxu0 %v286
        %620 = vmatprep.subr.mxu0 0.0
        %621 = vmatpush1.msra.mxu0 %v289
        %622 = vmatprep.subr.mxu0 0.0
        %623 = vmatpush1.msra.mxu0 %v292
        %624 = vmatprep.subr.mxu0 0.0
        %625 = vmatpush1.msra.mxu0 %v295
        %626 = vmatprep.subr.mxu0 0.0
        %627 = vmatpush1.msra.mxu0 %v298
        %628 = vmatprep.subr.mxu0 0.0
        %629 = vmatpush1.msra.mxu0 %v301
        %630 = vmatprep.subr.mxu0 0.0
        %631 = vmatpush1.msra.mxu0 %v304
        %632 = vmatprep.subr.mxu0 0.0
        %633 = vmatpush1.msra.mxu0 %v307
        %634 = vmatprep.subr.mxu0 0.0
        %635 = vmatpush1.msra.mxu0 %v310
        %636 = vmatprep.subr.mxu0 0.0
        %637 = vmatpush1.msra.mxu0 %v313
        %638 = vmatprep.subr.mxu0 0.0
        %639 = vmatpush1.msra.mxu0 %v316
        %640 = vmatprep.subr.mxu0 0.0
        %641 = vmatpush1.msra.mxu0 %v319
        %642 = vmatprep.subr.mxu0 0.0
        %643 = vmatpush1.msra.mxu0 %v322
        %644 = vmatprep.subr.mxu0 0.0
        %645 = vmatpush1.msra.mxu0 %v325
        %646 = vmatprep.subr.mxu0 0.0
        %647 = vmatpush1.msra.mxu0 %v328
        %648 = vmatprep.subr.mxu0 0.0
        %649 = vmatpush1.msra.mxu0 %v331
        %650 = vmatprep.subr.mxu0 0.0
        %651 = vmatpush1.msra.mxu0 %v334
        %652 = vmatprep.subr.mxu0 0.0
        %653 = vmatpush1.msra.mxu0 %v337
        %654 = vmatprep.subr.mxu0 0.0
        %655 = vmatpush1.msra.mxu0 %v340
        %656 = vmatprep.subr.mxu0 0.0
        %657 = vmatpush1.msra.mxu0 %v343
        %658 = vmatprep.mubr.f32.mxu0 %v241
        %659 = vmatmul.mubr.f32.gmra.mrb[0].mxu0 %v240
        %v660 = vpop.f32.mrb[0].mxu0
        %v661 = vadd.f32 %v429, %v660
        %v662 = vpop.f32.mrb[0].mxu0
        %663 = vmatprep.mubr.f32.mxu0 %v245
        %664 = vmatmul.mubr.f32.gmra.mrb[0].mxu0 %v244
        %v665 = vpop.f32.mrb[0].mxu0
        %v666 = vadd.f32 %v429, %v665
        %v667 = vpop.f32.mrb[0].mxu0
        %668 = vdwg.mxu0
        %669 = vmatprep.subr.mxu0 0.0
        %670 = vmatpush1.msra.mxu0 %v346
        %671 = vmatprep.subr.mxu0 0.0
        %672 = vmatpush1.msra.mxu0 %v349
        %673 = vmatprep.subr.mxu0 0.0
        %674 = vmatpush1.msra.mxu0 %v352
        %675 = vmatprep.subr.mxu0 0.0
        %676 = vmatpush1.msra.mxu0 %v355
        %677 = vmatprep.subr.mxu0 0.0
        %678 = vmatpush1.msra.mxu0 %v358
        %679 = vmatprep.subr.mxu0 0.0
        %680 = vmatpush1.msra.mxu0 %v361
        %681 = vmatprep.subr.mxu0 0.0
        %682 = vmatpush1.msra.mxu0 %v364
        %683 = vmatprep.subr.mxu0 0.0
        %684 = vmatpush1.msra.mxu0 %v367
        %685 = vmatprep.subr.mxu0 0.0
        %686 = vmatpush1.msra.mxu0 %v370
        %687 = vmatprep.subr.mxu0 0.0
        %688 = vmatpush1.msra.mxu0 %v373
        %689 = vmatprep.subr.mxu0 0.0
        %690 = vmatpush1.msra.mxu0 %v376
        %691 = vmatprep.subr.mxu0 0.0
        %692 = vmatpush1.msra.mxu0 %v379
        %693 = vmatprep.subr.mxu0 0.0
        %694 = vmatpush1.msra.mxu0 %v382
        %695 = vmatprep.subr.mxu0 0.0
        %696 = vmatpush1.msra.mxu0 %v385
        %697 = vmatprep.subr.mxu0 0.0
        %698 = vmatpush1.msra.mxu0 %v388
        %699 = vmatprep.subr.mxu0 0.0
        %700 = vmatpush1.msra.mxu0 %v391
        %701 = vmatprep.subr.mxu0 0.0
        %702 = vmatpush1.msra.mxu0 %v394
        %703 = vmatprep.subr.mxu0 0.0
        %704 = vmatpush1.msra.mxu0 %v397
        %705 = vmatprep.subr.mxu0 0.0
        %706 = vmatpush1.msra.mxu0 %v400
        %707 = vmatprep.subr.mxu0 0.0
        %708 = vmatpush1.msra.mxu0 %v403
        %709 = vmatprep.subr.mxu0 0.0
        %710 = vmatpush1.msra.mxu0 %v406
        %711 = vmatprep.subr.mxu0 0.0
        %712 = vmatpush1.msra.mxu0 %v409
        %713 = vmatprep.subr.mxu0 0.0
        %714 = vmatpush1.msra.mxu0 %v412
        %715 = vmatprep.subr.mxu0 0.0
        %716 = vmatpush1.msra.mxu0 %v415
        %717 = vmatprep.subr.mxu0 0.0
        %718 = vmatpush1.msra.mxu0 0.0
        %719 = vmatprep.subr.mxu0 0.0
        %720 = vmatpush1.msra.mxu0 0.0
        %721 = vmatprep.subr.mxu0 0.0
        %722 = vmatpush1.msra.mxu0 0.0
        %723 = vmatprep.subr.mxu0 0.0
        %724 = vmatpush1.msra.mxu0 0.0
        %725 = vmatprep.subr.mxu0 0.0
        %726 = vmatpush1.msra.mxu0 0.0
        %727 = vmatprep.subr.mxu0 0.0
        %728 = vmatpush1.msra.mxu0 0.0
        %729 = vmatprep.subr.mxu0 0.0
        %730 = vmatpush1.msra.mxu0 0.0
        %731 = vmatprep.subr.mxu0 0.0
        %732 = vmatpush1.msra.mxu0 0.0
        %733 = vmatprep.mubr.f32.mxu0 %v435
        %734 = vmatmul.mubr.f32.gmra.mrb[0].mxu0 %v242
        %v735 = vpop.f32.mrb[0].mxu0
        %v736 = vadd.f32 %v661, %v735
        %v737 = vpop.f32.mrb[0].mxu0
        %738 = vmatprep.mubr.f32.mxu0 %v438
        %739 = vmatmul.mubr.f32.gmra.mrb[0].mxu0 %v246
        %v740 = vpop.f32.mrb[0].mxu0
        %v741 = vadd.f32 %v666, %v740
        %v742 = vpop.f32.mrb[0].mxu0
        %743 = vdwg.mxu0
        %v744 = vtanh.pop %v584
        %v745 = vtanh.pop %v590
        %v746 = vxor.u32 %v584, 2147483648
        %v747 = vxor.u32 %v590, 2147483648
        %v748 = vmul.f32 %v746, 1.442695
        %v749 = vpow.pop %v748
        %v750 = vmul.f32 %v747, 1.442695
        %v751 = vpow.pop %v750
        %v752 = vadd.f32 %v749, 1.0
        %v753 = vadd.f32 %v751, 1.0
        %v754 = vrcp.pop %v752
        %v755 = vmul.f32 1.0, %v754
        %v756 = vrcp.pop %v753
        %v757 = vmul.f32 1.0, %v756
        %760 = vrot.lane.b32.xlu0 %v755, 64
        %v761 = vpop.permute.xlu0 %760
        %762 = vrot.lane.b32.xlu0 %v757, 64
        %v763 = vpop.permute.xlu0 %762
        %v766 = vmul.f32 %v744, %v761
        %v767 = vmul.f32 %v745, %v763
        %v768 = vtanh.pop %v586
        %v769 = vtanh.pop %v592
        %v770 = vxor.u32 %v586, 2147483648
        %v771 = vxor.u32 %v592, 2147483648
        %v772 = vmul.f32 %v770, 1.442695
        %v773 = vpow.pop %v772
        %v774 = vmul.f32 %v771, 1.442695
        %v775 = vpow.pop %v774
        %v776 = vadd.f32 %v773, 1.0
        %v777 = vadd.f32 %v775, 1.0
        %v778 = vrcp.pop %v776
        %v779 = vmul.f32 1.0, %v778
        %v780 = vrcp.pop %v777
        %v781 = vmul.f32 1.0, %v780
        %784 = vrot.lane.b32.xlu0 %v779, 64
        %v785 = vpop.permute.xlu0 %784
        %786 = vrot.lane.b32.xlu0 %v781, 64
        %v787 = vpop.permute.xlu0 %786
        %v790 = vmul.f32 %v768, %v785
        %v791 = vmul.f32 %v769, %v787
        %v792 = vtanh.pop %v736
        %v793 = vtanh.pop %v741
        %v794 = vxor.u32 %v736, 2147483648
        %v795 = vxor.u32 %v741, 2147483648
        %v796 = vmul.f32 %v794, 1.442695
        %v797 = vpow.pop %v796
        %v798 = vmul.f32 %v795, 1.442695
        %v799 = vpow.pop %v798
        %v800 = vadd.f32 %v797, 1.0
        %v801 = vadd.f32 %v799, 1.0
        %v802 = vrcp.pop %v800
        %v803 = vmul.f32 1.0, %v802
        %v804 = vrcp.pop %v801
        %v805 = vmul.f32 1.0, %v804
        %808 = vrot.lane.b32.xlu0 %v803, 64
        %v809 = vpop.permute.xlu0 %808
        %810 = vrot.lane.b32.xlu0 %v805, 64
        %v811 = vpop.permute.xlu0 %810
        %v814 = vmul.f32 %v792, %v809
        %v815 = vmul.f32 %v793, %v811
        %v816 = vld [vmem:[%s3] sm:$0xff]
        %v817 = vld [vmem:[%s3 + $0x8] sm:$0xff]
        %vm818 = vcmask 392192
        %v820 = vsel %vm818, %v816, 0
        %v823 = vsel %vm818, %v817, 0
        %825 = vmatprep.subr.mxu0 0.0
        %826 = vmatpush1.msra.mxu0 %v766
        %827 = vmatprep.subr.mxu0 0.0
        %828 = vmatpush1.msra.mxu0 %v767
        %829 = vmatprep.subr.mxu0 0.0
        %830 = vmatpush1.msra.mxu0 %v790
        %831 = vmatprep.subr.mxu0 0.0
        %832 = vmatpush1.msra.mxu0 %v791
        %833 = vmatprep.subr.mxu0 0.0
        %834 = vmatpush1.msra.mxu0 %v814
        %835 = vmatprep.subr.mxu0 0.0
        %836 = vmatpush1.msra.mxu0 %v815
        %837 = vmatprep.subr.mxu0 0.0
        %838 = vmatpush1.msra.mxu0 0.0
        %839 = vmatprep.subr.mxu0 0.0
        %840 = vmatpush1.msra.mxu0 0.0
        %841 = vmatprep.subr.mxu0 0.0
        %842 = vmatpush1.msra.mxu0 0.0
        %843 = vmatprep.subr.mxu0 0.0
        %844 = vmatpush1.msra.mxu0 0.0
        %845 = vmatprep.subr.mxu0 0.0
        %846 = vmatpush1.msra.mxu0 0.0
        %847 = vmatprep.subr.mxu0 0.0
        %848 = vmatpush1.msra.mxu0 0.0
        %849 = vmatprep.subr.mxu0 0.0
        %850 = vmatpush1.msra.mxu0 0.0
        %851 = vmatprep.subr.mxu0 0.0
        %852 = vmatpush1.msra.mxu0 0.0
        %853 = vmatprep.subr.mxu0 0.0
        %854 = vmatpush1.msra.mxu0 0.0
        %855 = vmatprep.subr.mxu0 0.0
        %856 = vmatpush1.msra.mxu0 0.0
        %857 = vmatprep.subr.mxu0 0.0
        %858 = vmatpush1.msra.mxu0 0.0
        %859 = vmatprep.subr.mxu0 0.0
        %860 = vmatpush1.msra.mxu0 0.0
        %861 = vmatprep.subr.mxu0 0.0
        %862 = vmatpush1.msra.mxu0 0.0
        %863 = vmatprep.subr.mxu0 0.0
        %864 = vmatpush1.msra.mxu0 0.0
        %865 = vmatprep.subr.mxu0 0.0
        %866 = vmatpush1.msra.mxu0 0.0
        %867 = vmatprep.subr.mxu0 0.0
        %868 = vmatpush1.msra.mxu0 0.0
        %869 = vmatprep.subr.mxu0 0.0
        %870 = vmatpush1.msra.mxu0 0.0
        %871 = vmatprep.subr.mxu0 0.0
        %872 = vmatpush1.msra.mxu0 0.0
        %873 = vmatprep.subr.mxu0 0.0
        %874 = vmatpush1.msra.mxu0 0.0
        %875 = vmatprep.subr.mxu0 0.0
        %876 = vmatpush1.msra.mxu0 0.0
        %877 = vmatprep.subr.mxu0 0.0
        %878 = vmatpush1.msra.mxu0 0.0
        %879 = vmatprep.subr.mxu0 0.0
        %880 = vmatpush1.msra.mxu0 0.0
        %881 = vmatprep.subr.mxu0 0.0
        %882 = vmatpush1.msra.mxu0 0.0
        %883 = vmatprep.subr.mxu0 0.0
        %884 = vmatpush1.msra.mxu0 0.0
        %885 = vmatprep.subr.mxu0 0.0
        %886 = vmatpush1.msra.mxu0 0.0
        %887 = vmatprep.subr.mxu0 0.0
        %888 = vmatpush1.msra.mxu0 0.0
        %889 = vmatprep.mubr.f32.mxu0 0.0
        %890 = vmatmul.mubr.f32.gmra.mrb[0].mxu0 %v820
        %v891 = vpop.f32.mrb[0].mxu0
        %v892 = vadd.f32 0.0, %v891
        %v893 = vpop.f32.mrb[0].mxu0
        %894 = vmatprep.mubr.f32.mxu0 0.0
        %895 = vmatmul.mubr.f32.gmra.mrb[0].mxu0 %v823
        %v896 = vpop.f32.mrb[0].mxu0
        %v897 = vadd.f32 0.0, %v896
        %v898 = vpop.f32.mrb[0].mxu0
        %899 = vdwg.mxu0
        %v900 = vadd.f32 %v240, %v892
        %v901 = vadd.f32 %v244, %v897
        %v902 = vld [vmem:[%s4] sm:$0xff]
        %v903 = vld [vmem:[%s4 + $0x8] sm:$0xff]
        %905 = vset.pattern.permute.xlu0 0
        %906 = vperm.xlu0 %905, %v902
        %v907 = vpop.permute.xlu0 %906
        %910 = vset.pattern.permute.xlu0 0
        %911 = vperm.xlu0 %910, %v903
        %v912 = vpop.permute.xlu0 %911
        %v914 = vadd.f32 %v900, %v907
        %v915 = vadd.f32 %v901, %v912
        %v916 = vmax.f32 %v914, 0.0
        %v917 = vmax.f32 %v915, 0.0
        %918 = vst.msk [vmem:[%s239] sm:$0xff] %vm433, %v916
        %919 = vst.msk [vmem:[%s239 + $0x8] sm:$0xff] %vm433, %v917
        %p920 = scmp.lt.s32.totalorder %s17, 1
        %s921 = scalar_select %p920, %s17, 1
        %s922 = smul.addr %s921, 2
        %s923 = smul.addr %s922, 8
        %s924 = scalar_lea.vmem %s5, %s923
        // Predicated region
        $region45: #{multi_gtu_forward.1} parent=39 // pred_check
          %p925 = pneg %p145
        $region46: #{multi_gtu_forward.1} parent=39 // pred_check_branch
          %927 = sbr.rel (%p925) target = $region48
        $region47: #{multi_gtu_forward.1} parent=39 // pred_region
          _
        $region48: #{multi_gtu_forward.1} parent=39 // pred_fallthru
          _
      $region40: #{multi_gtu_forward.1} parent=5 // pred_fallthru
        _
      %p928 = scmp.le.s32.totalorder 2, %s12
      // Predicated region
      $region49: #{multi_gtu_forward.1} parent=5 // pred_check
        %p929 = pneg %p928
      $region50: #{multi_gtu_forward.1} parent=5 // pred_check_branch
        %931 = sbr.rel (%p929) target = $region52
      $region51: #{multi_gtu_forward.1} parent=5 // pred_region
        %s932 = ssub.s32 %s12, 2
        // Predicated region
        $region53: #{multi_gtu_forward.1} parent=51 // pred_check
          %p933 = pneg %p151
        $region54: #{multi_gtu_forward.1} parent=51 // pred_check_branch
          %935 = sbr.rel (%p933) target = $region56
        $region55: #{multi_gtu_forward.1} parent=51 // pred_region
          %p936 = scmp.lt.s32.totalorder %s18, 1
          %s937 = scalar_select %p936, %s18, 1
          %s938 = smul.addr %s937, 2
          %s939 = smul.addr %s938, 8
          %s940 = scalar_lea.vmem %s5, %s939
        $region56: #{multi_gtu_forward.1} parent=51 // pred_fallthru
          _
      $region52: #{multi_gtu_forward.1} parent=5 // pred_fallthru
        _
    $region6: #{multi_gtu_forward.1} parent=1 // loop_footer
      %s16 = sadd.s32 1, %s12
    $region7: #{multi_gtu_forward.1} parent=1 // loop_footer_branch
      %11 = sbr.rel target = $region3
    $region8: #{multi_gtu_forward.1} parent=1 // loop_exit
      _
    %941 = vsyncpa [#allocation3], 1
    %s942 = scalar_lea.sflag [#allocation3], 1
    %943 = vsyncpa %s942, 1

</llo_original>
